<compile_context>
chip_gen: v7x
topology: tpu7x:2x2x1
jax: 0.10.0
libtpu: 0.0.40
codegen_flags: <defaults>
</compile_context>

<pallas_src>
import functools

import jax
import jax.numpy as jnp
from jax import lax
from jax.experimental import pallas as pl
from jax.experimental.pallas import tpu as pltpu


def _ce_loss_partial_kernel(pred_ref, target_ref, out_ref, *, n_rows, tile_rows):
    """Per-tile partial of sum(-log_softmax(pred, axis=1) * target)."""
    x = pred_ref[...].astype(jnp.float32)      # (TN, C)
    t = target_ref[...].astype(jnp.float32)    # (TN, C)
    c = x.shape[1]

    # Row max: the only cross-lane (XLU) reduction we keep.
    m = jnp.max(x, axis=1, keepdims=True)                                # (TN, 1)

    # Lane-axis sums offloaded to the (otherwise idle) MXU: one vmatmul push per
    # (8,128) vreg instead of a ~7-op XLU rotate/add tree each.
    ones_c = jnp.ones((c, 1), dtype=jnp.float32)
    e_sum = jnp.dot(jnp.exp(x - m), ones_c,
                    preferred_element_type=jnp.float32)                  # (TN, 1)
    t_sum = jnp.dot(t, ones_c, preferred_element_type=jnp.float32)       # (TN, 1)
    tx_sum = jnp.dot(t * x, ones_c, preferred_element_type=jnp.float32)  # (TN, 1)

    lse = jnp.log(e_sum)                                                 # (TN, 1)

    # -sum_c(t * (x - m - lse)) == sum_c(t) * (m + lse) - sum_c(t * x).
    # (x - m) now feeds ONLY exp(); t*x fuses per-vreg -> one fewer full-tile
    # f32 intermediate in VMEM.
    row_loss = t_sum * (m + lse) - tx_sum                                # (TN, 1)

    # Mask padded rows of the final tile (static check: emitted only if needed).
    # Garbage padded rows stay confined to their own row (max/exp/log and matmul
    # rows are row-independent), so the select fully removes them.
    if n_rows % tile_rows != 0:
        i = pl.program_id(0)
        row_ids = i * tile_rows + lax.broadcasted_iota(jnp.int32, row_loss.shape, 0)
        row_loss = jnp.where(row_ids < n_rows, row_loss, 0.0)

    partial = jnp.sum(row_loss)
    # Lane-dense, unmasked (8, 128) store; wrapper reads element [0, 0] per tile.
    out_ref[...] = jnp.full(out_ref.shape, partial, dtype=jnp.float32)


def _vmem_limit_and_is_small_vmem():
    """Returns (vmem_limit_bytes, is_small_vmem).

    ~3/4 of physical VMEM: 96 MiB on 128-MiB chips (v5e/v6e), 48 MiB on 64-MiB
    chips (v7x). Falls back conservatively if the query is unavailable."""
    try:
        cap = int(pltpu.get_tpu_info().vmem_capacity_bytes)
    except Exception:  # non-TPU backend / API drift -> safe on every generation
        cap = 64 * 1024 * 1024
    return (cap * 3) // 4, cap <= 64 * 1024 * 1024


def _sublane_multiple(itemsize: int) -> int:
    # f32 -> 8, bf16 -> 16, int8/fp8 -> 32 sublanes per packed tile.
    return {4: 8, 2: 16, 1: 32}.get(itemsize, 8)


def _choose_tile_rows(n_rows: int, n_cols: int, in_itemsize: int,
                      sublane: int, small_vmem: bool) -> int:
    """Layout-aware row-tile size.

    Per-tile-row VMEM cost uses the lane-PADDED width:
      - 2 inputs x 2 pipeline buffers in the input dtype,
      - ~3 full-width f32 intermediates (exp(x-m), t*x, upcasts).
    Budget ~24 MiB of working set on 128-MiB-VMEM chips (=> ~2-4 MiB per input
    buffer, near the ~86% HBM-roofline knee) and ~8 MiB on 64-MiB (v7x-class)
    chips (=> ~1-2 MiB per buffer)."""
    padded_c = max(128, ((n_cols + 127) // 128) * 128)
    bytes_per_row = 2 * 2 * padded_c * in_itemsize + 3 * padded_c * 4
    budget = (8 if small_vmem else 24) * 1024 * 1024
    rows = budget // bytes_per_row
    rows = max(sublane, min(4096, (rows // sublane) * sublane))
    if n_rows <= rows:
        return n_rows                        # single tile: block == full dim
    return int(rows)


def ssfl_ids_ce_loss(pred_pro: jax.Array, target_tensor: jax.Array) -> jax.Array:
    """Pallas TPU implementation of SSFL_IDS_CELoss.forward. Returns a scalar."""
    assert pred_pro.shape == target_tensor.shape
    assert pred_pro.ndim == 2, "expecting (N, C) inputs"
    n, c = pred_pro.shape
    # TODO(synk): for tiny N*C (< ~1e5 elements) plain jax.nn.log_softmax is
    # faster (launch/DMA overhead dominates); kept on the kernel path here so
    # the Pallas implementation is exercised.

    vmem_limit, small_vmem = _vmem_limit_and_is_small_vmem()
    p_isz = jnp.dtype(pred_pro.dtype).itemsize
    t_isz = jnp.dtype(target_tensor.dtype).itemsize
    in_itemsize = max(p_isz, t_isz)
    sublane = max(_sublane_multiple(p_isz), _sublane_multiple(t_isz))

    tn = _choose_tile_rows(n, c, in_itemsize, sublane, small_vmem)
    num_tiles = pl.cdiv(n, tn)

    # v7x-class chips have 2 TensorCores: with a tiny odd 'parallel' grid one TC
    # gets ~2x the work. Shave tn so small grids end up with an even tile count.
    if small_vmem and 1 < num_tiles < 16 and num_tiles % 2 == 1:
        tn_try = tn
        while tn_try > sublane and pl.cdiv(n, tn_try) % 2 == 1:
            tn_try -= sublane
        if pl.cdiv(n, tn_try) % 2 == 0:
            tn = tn_try
            num_tiles = pl.cdiv(n, tn)

    kernel = functools.partial(_ce_loss_partial_kernel, n_rows=n, tile_rows=tn)

    cost = pl.CostEstimate(
        flops=8 * n * c,                       # sub, mul + 3 ones-matvec reductions
        transcendentals=n * c + n,             # exp per element + log per row
        bytes_accessed=n * c * (p_isz + t_isz) + num_tiles * 8 * 128 * 4,
    )

    partials = pl.pallas_call(
        kernel,
        out_shape=jax.ShapeDtypeStruct((num_tiles, 8, 128), jnp.float32),
        grid_spec=pltpu.PrefetchScalarGridSpec(
            num_scalar_prefetch=0,
            grid=(num_tiles,),
            in_specs=[
                # TODO(synk): bump to pipeline_mode=pl.Buffered(3) only if an
                # xprof trace shows inter-step DMA gaps (most likely on v7x).
                pl.BlockSpec((tn, c), lambda i: (i, 0)),
                pl.BlockSpec((tn, c), lambda i: (i, 0)),
            ],
            out_specs=pl.BlockSpec((1, 8, 128), lambda i: (i, 0, 0)),
        ),
        compiler_params=pltpu.CompilerParams(
            dimension_semantics=("parallel",),   # independent tiles -> v7x 2 TCs
            vmem_limit_bytes=int(vmem_limit),
        ),
        cost_estimate=cost,
    )(pred_pro, target_tensor)

    # Final tiny reduction + division by the TRUE batch size in plain JAX.
    # Note: loss is returned in float32 regardless of input dtype (matches the
    # f32 reference; cast at the call site if e.g. a bf16 loss is required).
    return jnp.sum(partials[:, 0, 0]) / jnp.float32(n)


def _reference(pred_pro, target_tensor):
    logp = jax.nn.log_softmax(pred_pro.astype(jnp.float32), axis=1)
    return jnp.sum(-logp * target_tensor.astype(jnp.float32)) / pred_pro.shape[0]


if __name__ == "__main__":
    key = jax.random.PRNGKey(0)
    k1, k2 = jax.random.split(key)

    N, C = 8, 32  # small synthetic shapes: batch=8, classes=32
    pred_pro = jax.random.normal(k1, (N, C), dtype=jnp.float32)
    # Soft targets (probability rows), as typically fed to this loss.
    target_logits = jax.random.normal(k2, (N, C), dtype=jnp.float32)
    target_tensor = jax.nn.softmax(target_logits, axis=1)

    loss = ssfl_ids_ce_loss(pred_pro, target_tensor)
    jax.block_until_ready(loss)

    ref = _reference(pred_pro, target_tensor)
    assert jnp.allclose(loss, ref, rtol=1e-5, atol=1e-5), (loss, ref)

    print("KERNEL_OK")
</pallas_src>

<mosaic_0001>
module attributes {stable_mosaic.version = 11 : i64} {
  func.func @_ce_loss_partial_kernel(%arg0: i32, %arg1: memref<8x32xf32, #tpu.memory_space<vmem>>, %arg2: memref<8x32xf32, #tpu.memory_space<vmem>>, %arg3: memref<1x8x128xf32, #tpu.memory_space<vmem>>) attributes {dimension_semantics = [#tpu.dimension_semantics<parallel>], iteration_bounds = array<i64: 1>, scalar_prefetch = 0 : i64, scratch_operands = 0 : i64, tpu.core_type = #tpu.core_type<tc>, window_params = [{transform_indices = @transform_0, window_bounds = array<i64: 8, 32>}, {transform_indices = @transform_1, window_bounds = array<i64: 8, 32>}, {transform_indices = @transform_2, window_bounds = array<i64: 1, 8, 128>}]} {
    %c0 = arith.constant 0 : index
    %c0_0 = arith.constant 0 : index
    %0 = vector.load %arg1[%c0, %c0_0] : memref<8x32xf32, #tpu.memory_space<vmem>>, vector<8x32xf32>
    %c0_1 = arith.constant 0 : index
    %c0_2 = arith.constant 0 : index
    %1 = vector.load %arg2[%c0_1, %c0_2] : memref<8x32xf32, #tpu.memory_space<vmem>>, vector<8x32xf32>
    %cst = arith.constant dense<0xFF800000> : vector<8xf32>
    %2 = vector.multi_reduction <maximumf>, %0, %cst [1] : vector<8x32xf32> to vector<8xf32>
    %3 = vector.shape_cast %2 : vector<8xf32> to vector<8x1xf32>
    %cst_3 = arith.constant 1.000000e+00 : f32
    %4 = vector.broadcast %cst_3 : f32 to vector<32x1xf32>
    %5 = vector.broadcast %3 : vector<8x1xf32> to vector<8x32xf32>
    %6 = arith.subf %0, %5 : vector<8x32xf32>
    %7 = math.exp %6 : vector<8x32xf32>
    %cst_4 = arith.constant dense<0.000000e+00> : vector<8x1xf32>
    %8 = tpu.matmul %7, %4, %cst_4 {dimension_numbers = #tpu.dot_dimension_numbers<[1], [0], [0], [1], [0, 0, 1, 1], [], []>} : vector<8x32xf32>, vector<32x1xf32>, vector<8x1xf32> -> vector<8x1xf32>
    %cst_5 = arith.constant dense<0.000000e+00> : vector<8x1xf32>
    %9 = tpu.matmul %1, %4, %cst_5 {dimension_numbers = #tpu.dot_dimension_numbers<[1], [0], [0], [1], [0, 0, 1, 1], [], []>} : vector<8x32xf32>, vector<32x1xf32>, vector<8x1xf32> -> vector<8x1xf32>
    %10 = arith.mulf %1, %0 : vector<8x32xf32>
    %cst_6 = arith.constant dense<0.000000e+00> : vector<8x1xf32>
    %11 = tpu.matmul %10, %4, %cst_6 {dimension_numbers = #tpu.dot_dimension_numbers<[1], [0], [0], [1], [0, 0, 1, 1], [], []>} : vector<8x32xf32>, vector<32x1xf32>, vector<8x1xf32> -> vector<8x1xf32>
    %12 = math.log %8 : vector<8x1xf32>
    %13 = arith.addf %3, %12 : vector<8x1xf32>
    %14 = arith.mulf %9, %13 : vector<8x1xf32>
    %15 = arith.subf %14, %11 : vector<8x1xf32>
    %16 = vector.shape_cast %15 : vector<8x1xf32> to vector<1x8x1xf32>
    %cst_7 = arith.constant dense<0.000000e+00> : vector<1xf32>
    %17 = vector.multi_reduction <add>, %16, %cst_7 [1, 2] : vector<1x8x1xf32> to vector<1xf32>
    %18 = vector.shape_cast %17 : vector<1xf32> to vector<1x1x1xf32>
    %19 = vector.extract %18[0, 0, 0] : f32 from vector<1x1x1xf32>
    %20 = vector.broadcast %19 : f32 to vector<1x8x128xf32>
    %c0_8 = arith.constant 0 : index
    %c0_9 = arith.constant 0 : index
    %c0_10 = arith.constant 0 : index
    %21 = vector.load %arg3[%c0_8, %c0_9, %c0_10] : memref<1x8x128xf32, #tpu.memory_space<vmem>>, vector<1x8x128xf32>
    tpu.vector_store %arg3[%c0_8, %c0_9, %c0_10], %20 {strides = array<i32>} : memref<1x8x128xf32, #tpu.memory_space<vmem>>, vector<1x8x128xf32>,
    return
  }
  func.func @transform_0(%arg0: i32) -> (i32, i32) {
    %c0_i32 = arith.constant 0 : i32
    %c0_i32_0 = arith.constant 0 : i32
    return %arg0, %c0_i32 : i32, i32
  }
  func.func @transform_1(%arg0: i32) -> (i32, i32) {
    %c0_i32 = arith.constant 0 : i32
    %c0_i32_0 = arith.constant 0 : i32
    return %arg0, %c0_i32 : i32, i32
  }
  func.func @transform_2(%arg0: i32) -> (i32, i32, i32) {
    %c0_i32 = arith.constant 0 : i32
    %c0_i32_0 = arith.constant 0 : i32
    %c0_i32_1 = arith.constant 0 : i32
    return %arg0, %c0_i32, %c0_i32_0 : i32, i32, i32
  }
}

</mosaic_0001>

<llo_original>
// kernel: tpu_custom_call.1
$region0: #{tpu_custom_call.1}
  #allocation0 [shape = 'u32[]', space=smem, size = 0x4, offset = 0x4, fixed_abs, tag = 'smem constant byte address 0x4 - core index']
  #allocation1 [shape = 'u32[144,128]{1,0:T(1,128)}', space=vmem, size = 0x12000, scoped, tag = 'internal scratch']
  %s0 = inlined_call_operand.hbm [shape: f32[8,32], index: 0, kind: input, shape index: {}]
  %s1 = inlined_call_operand.hbm [shape: f32[8,32], index: 1, kind: input, shape index: {}]
  %s2 = inlined_call_operand.hbm [shape: f32[1,8,128], index: 2, kind: output, shape index: {}]
  %s3 = sld [smem:[#allocation0]]
  $region26: #{tpu_custom_call.1} parent=0
    _
  %s5 = ssub.s32 1, %s3
  %s6 = scalar_select 0, %s5, %s3
  $region1: #{tpu_custom_call.1} parent=0
    #allocation2 [shape = 'u8[4096]{0}', space=vmem, size = 0x1000, scoped, tag = 'input window, operand 0, single buffered']
    #allocation3 [shape = 's32[1]{0}', space=sflag, size = 0x4, scoped, tag = 'scoped memory for tpu_custom_call.1']
    #allocation4 [shape = 's32[1]{0}', space=sflag, size = 0x4, scoped, tag = 'scoped memory for tpu_custom_call.1']
    #allocation5 [shape = 'u8[4096]{0}', space=vmem, size = 0x1000, scoped, tag = 'input window, operand 1, single buffered']
    #allocation6 [shape = 's32[1]{0}', space=sflag, size = 0x4, scoped, tag = 'scoped memory for tpu_custom_call.1']
    #allocation7 [shape = 'u8[4096]{0}', space=vmem, size = 0x1000, scoped, tag = 'output window, operand 0, single buffered']
    %7 = vsyncpa [#allocation3], 0
    %8 = vsyncpa [#allocation6], 0
    %9 = vsyncpa [#allocation4], 0
    // Predicated region
    $region2: #{tpu_custom_call.1} parent=1 // pred_check
      _
    $region3: #{tpu_custom_call.1} parent=1 // pred_check_branch
      %11 = sbr.rel (0) target = $region5
    $region4: #{tpu_custom_call.1} parent=1 // pred_region
      %s13 = ssub.s32 128, 128
      %14 = vsyncadd [#allocation3], %s13
      %s16 = sshll.u32 [#allocation2], 4
      %s17 = int_to_ptr.vmem [resolvable:$true] %s16
      %19 = dma.hbm_to_vmem [thread:$0]  %s0, 128, %s17, [#allocation3]
    $region5: #{tpu_custom_call.1} parent=1 // pred_fallthru
      _
    // Predicated region
    $region6: #{tpu_custom_call.1} parent=1 // pred_check
      _
    $region7: #{tpu_custom_call.1} parent=1 // pred_check_branch
      %21 = sbr.rel (0) target = $region9
    $region8: #{tpu_custom_call.1} parent=1 // pred_region
      %s23 = ssub.s32 128, 128
      %24 = vsyncadd [#allocation6], %s23
      %s26 = sshll.u32 [#allocation5], 4
      %s27 = int_to_ptr.vmem [resolvable:$true] %s26
      %29 = dma.hbm_to_vmem [thread:$0]  %s1, 128, %s27, [#allocation6]
    $region9: #{tpu_custom_call.1} parent=1 // pred_fallthru
      _
    // Predicated region
    $region10: #{tpu_custom_call.1} parent=1 // pred_check
      _
    $region11: #{tpu_custom_call.1} parent=1 // pred_check_branch
      %31 = sbr.rel (0) target = $region13
    $region12: #{tpu_custom_call.1} parent=1 // pred_region
      %32 = dma.done [#allocation3], 128
    $region13: #{tpu_custom_call.1} parent=1 // pred_fallthru
      _
    // Predicated region
    $region14: #{tpu_custom_call.1} parent=1 // pred_check
      _
    $region15: #{tpu_custom_call.1} parent=1 // pred_check_branch
      %34 = sbr.rel (0) target = $region17
    $region16: #{tpu_custom_call.1} parent=1 // pred_region
      %35 = dma.done [#allocation6], 128
    $region17: #{tpu_custom_call.1} parent=1 // pred_fallthru
      _
    %v36 = vld [vmem:[#allocation2] sm:$0xff]
    %v37 = vld [vmem:[#allocation5] sm:$0xff]
    %vm38 = vcmask 261120
    %v39 = vsel %vm38, %v36, -inf
    %40 = vmax.xlane.f32.xlu0 %v39
    %v41 = vpop.xlane.xlu0 %40
    %v42 = vsub.f32 %v36, %v41
    %v43 = vmul.f32 %v42, 1.442695
    %v44 = vpow.pop %v43
    %v46 = vsel %vm38, %v44, 0
    %48 = vmatprep.subr.mxu0 0.0
    %49 = vmatpush1.msra.mxu0 1.0
    %50 = vmatprep.subr.mxu0 0.0
    %51 = vmatpush1.msra.mxu0 1.0
    %52 = vmatprep.subr.mxu0 0.0
    %53 = vmatpush1.msra.mxu0 1.0
    %54 = vmatprep.subr.mxu0 0.0
    %55 = vmatpush1.msra.mxu0 1.0
    %56 = vmatprep.subr.mxu0 0.0
    %57 = vmatpush1.msra.mxu0 0.0
    %58 = vmatprep.subr.mxu0 0.0
    %59 = vmatpush1.msra.mxu0 0.0
    %60 = vmatprep.subr.mxu0 0.0
    %61 = vmatpush1.msra.mxu0 0.0
    %62 = vmatprep.subr.mxu0 0.0
    %63 = vmatpush1.msra.mxu0 0.0
    %64 = vmatprep.subr.mxu0 0.0
    %65 = vmatpush1.msra.mxu0 0.0
    %66 = vmatprep.subr.mxu0 0.0
    %67 = vmatpush1.msra.mxu0 0.0
    %68 = vmatprep.subr.mxu0 0.0
    %69 = vmatpush1.msra.mxu0 0.0
    %70 = vmatprep.subr.mxu0 0.0
    %71 = vmatpush1.msra.mxu0 0.0
    %72 = vmatprep.subr.mxu0 0.0
    %73 = vmatpush1.msra.mxu0 0.0
    %74 = vmatprep.subr.mxu0 0.0
    %75 = vmatpush1.msra.mxu0 0.0
    %76 = vmatprep.subr.mxu0 0.0
    %77 = vmatpush1.msra.mxu0 0.0
    %78 = vmatprep.subr.mxu0 0.0
    %79 = vmatpush1.msra.mxu0 0.0
    %80 = vmatprep.subr.mxu0 0.0
    %81 = vmatpush1.msra.mxu0 0.0
    %82 = vmatprep.subr.mxu0 0.0
    %83 = vmatpush1.msra.mxu0 0.0
    %84 = vmatprep.subr.mxu0 0.0
    %85 = vmatpush1.msra.mxu0 0.0
    %86 = vmatprep.subr.mxu0 0.0
    %87 = vmatpush1.msra.mxu0 0.0
    %88 = vmatprep.subr.mxu0 0.0
    %89 = vmatpush1.msra.mxu0 0.0
    %90 = vmatprep.subr.mxu0 0.0
    %91 = vmatpush1.msra.mxu0 0.0
    %92 = vmatprep.subr.mxu0 0.0
    %93 = vmatpush1.msra.mxu0 0.0
    %94 = vmatprep.subr.mxu0 0.0
    %95 = vmatpush1.msra.mxu0 0.0
    %96 = vmatprep.subr.mxu0 0.0
    %97 = vmatpush1.msra.mxu0 0.0
    %98 = vmatprep.subr.mxu0 0.0
    %99 = vmatpush1.msra.mxu0 0.0
    %100 = vmatprep.subr.mxu0 0.0
    %101 = vmatpush1.msra.mxu0 0.0
    %102 = vmatprep.subr.mxu0 0.0
    %103 = vmatpush1.msra.mxu0 0.0
    %104 = vmatprep.subr.mxu0 0.0
    %105 = vmatpush1.msra.mxu0 0.0
    %106 = vmatprep.subr.mxu0 0.0
    %107 = vmatpush1.msra.mxu0 0.0
    %108 = vmatprep.subr.mxu0 0.0
    %109 = vmatpush1.msra.mxu0 0.0
    %110 = vmatprep.subr.mxu0 0.0
    %111 = vmatpush1.msra.mxu0 0.0
    %112 = vmatprep.mubr.f32.mxu0 0.0
    %113 = vmatmul.mubr.f32.gmra.mrb[0].mxu0 %v46
    %v114 = vpop.f32.mrb[0].mxu0
    %v115 = vadd.f32 0.0, %v114
    %v116 = vpop.f32.mrb[0].mxu0
    %117 = vdwg.mxu0
    %v119 = vsel %vm38, %v37, 0
    %121 = vmatprep.subr.mxu0 0.0
    %122 = vmatpush1.msra.mxu0 1.0
    %123 = vmatprep.subr.mxu0 0.0
    %124 = vmatpush1.msra.mxu0 1.0
    %125 = vmatprep.subr.mxu0 0.0
    %126 = vmatpush1.msra.mxu0 1.0
    %127 = vmatprep.subr.mxu0 0.0
    %128 = vmatpush1.msra.mxu0 1.0
    %129 = vmatprep.subr.mxu0 0.0
    %130 = vmatpush1.msra.mxu0 0.0
    %131 = vmatprep.subr.mxu0 0.0
    %132 = vmatpush1.msra.mxu0 0.0
    %133 = vmatprep.subr.mxu0 0.0
    %134 = vmatpush1.msra.mxu0 0.0
    %135 = vmatprep.subr.mxu0 0.0
    %136 = vmatpush1.msra.mxu0 0.0
    %137 = vmatprep.subr.mxu0 0.0
    %138 = vmatpush1.msra.mxu0 0.0
    %139 = vmatprep.subr.mxu0 0.0
    %140 = vmatpush1.msra.mxu0 0.0
    %141 = vmatprep.subr.mxu0 0.0
    %142 = vmatpush1.msra.mxu0 0.0
    %143 = vmatprep.subr.mxu0 0.0
    %144 = vmatpush1.msra.mxu0 0.0
    %145 = vmatprep.subr.mxu0 0.0
    %146 = vmatpush1.msra.mxu0 0.0
    %147 = vmatprep.subr.mxu0 0.0
    %148 = vmatpush1.msra.mxu0 0.0
    %149 = vmatprep.subr.mxu0 0.0
    %150 = vmatpush1.msra.mxu0 0.0
    %151 = vmatprep.subr.mxu0 0.0
    %152 = vmatpush1.msra.mxu0 0.0
    %153 = vmatprep.subr.mxu0 0.0
    %154 = vmatpush1.msra.mxu0 0.0
    %155 = vmatprep.subr.mxu0 0.0
    %156 = vmatpush1.msra.mxu0 0.0
    %157 = vmatprep.subr.mxu0 0.0
    %158 = vmatpush1.msra.mxu0 0.0
    %159 = vmatprep.subr.mxu0 0.0
    %160 = vmatpush1.msra.mxu0 0.0
    %161 = vmatprep.subr.mxu0 0.0
    %162 = vmatpush1.msra.mxu0 0.0
    %163 = vmatprep.subr.mxu0 0.0
    %164 = vmatpush1.msra.mxu0 0.0
    %165 = vmatprep.subr.mxu0 0.0
    %166 = vmatpush1.msra.mxu0 0.0
    %167 = vmatprep.subr.mxu0 0.0
    %168 = vmatpush1.msra.mxu0 0.0
    %169 = vmatprep.subr.mxu0 0.0
    %170 = vmatpush1.msra.mxu0 0.0
    %171 = vmatprep.subr.mxu0 0.0
    %172 = vmatpush1.msra.mxu0 0.0
    %173 = vmatprep.subr.mxu0 0.0
    %174 = vmatpush1.msra.mxu0 0.0
    %175 = vmatprep.subr.mxu0 0.0
    %176 = vmatpush1.msra.mxu0 0.0
    %177 = vmatprep.subr.mxu0 0.0
    %178 = vmatpush1.msra.mxu0 0.0
    %179 = vmatprep.subr.mxu0 0.0
    %180 = vmatpush1.msra.mxu0 0.0
    %181 = vmatprep.subr.mxu0 0.0
    %182 = vmatpush1.msra.mxu0 0.0
    %183 = vmatprep.subr.mxu0 0.0
    %184 = vmatpush1.msra.mxu0 0.0
    %185 = vmatprep.mubr.f32.mxu0 0.0
    %186 = vmatmul.mubr.f32.gmra.mrb[0].mxu0 %v119
    %v187 = vpop.f32.mrb[0].mxu0
    %v188 = vadd.f32 0.0, %v187
    %v189 = vpop.f32.mrb[0].mxu0
    %190 = vdwg.mxu0
    %v191 = vmul.f32 %v37, %v36
    %v193 = vsel %vm38, %v191, 0
    %195 = vmatprep.subr.mxu0 0.0
    %196 = vmatpush1.msra.mxu0 1.0
    %197 = vmatprep.subr.mxu0 0.0
    %198 = vmatpush1.msra.mxu0 1.0
    %199 = vmatprep.subr.mxu0 0.0
    %200 = vmatpush1.msra.mxu0 1.0
    %201 = vmatprep.subr.mxu0 0.0
    %202 = vmatpush1.msra.mxu0 1.0
    %203 = vmatprep.subr.mxu0 0.0
    %204 = vmatpush1.msra.mxu0 0.0
    %205 = vmatprep.subr.mxu0 0.0
    %206 = vmatpush1.msra.mxu0 0.0
    %207 = vmatprep.subr.mxu0 0.0
    %208 = vmatpush1.msra.mxu0 0.0
    %209 = vmatprep.subr.mxu0 0.0
    %210 = vmatpush1.msra.mxu0 0.0
    %211 = vmatprep.subr.mxu0 0.0
    %212 = vmatpush1.msra.mxu0 0.0
    %213 = vmatprep.subr.mxu0 0.0
    %214 = vmatpush1.msra.mxu0 0.0
    %215 = vmatprep.subr.mxu0 0.0
    %216 = vmatpush1.msra.mxu0 0.0
    %217 = vmatprep.subr.mxu0 0.0
    %218 = vmatpush1.msra.mxu0 0.0
    %219 = vmatprep.subr.mxu0 0.0
    %220 = vmatpush1.msra.mxu0 0.0
    %221 = vmatprep.subr.mxu0 0.0
    %222 = vmatpush1.msra.mxu0 0.0
    %223 = vmatprep.subr.mxu0 0.0
    %224 = vmatpush1.msra.mxu0 0.0
    %225 = vmatprep.subr.mxu0 0.0
    %226 = vmatpush1.msra.mxu0 0.0
    %227 = vmatprep.subr.mxu0 0.0
    %228 = vmatpush1.msra.mxu0 0.0
    %229 = vmatprep.subr.mxu0 0.0
    %230 = vmatpush1.msra.mxu0 0.0
    %231 = vmatprep.subr.mxu0 0.0
    %232 = vmatpush1.msra.mxu0 0.0
    %233 = vmatprep.subr.mxu0 0.0
    %234 = vmatpush1.msra.mxu0 0.0
    %235 = vmatprep.subr.mxu0 0.0
    %236 = vmatpush1.msra.mxu0 0.0
    %237 = vmatprep.subr.mxu0 0.0
    %238 = vmatpush1.msra.mxu0 0.0
    %239 = vmatprep.subr.mxu0 0.0
    %240 = vmatpush1.msra.mxu0 0.0
    %241 = vmatprep.subr.mxu0 0.0
    %242 = vmatpush1.msra.mxu0 0.0
    %243 = vmatprep.subr.mxu0 0.0
    %244 = vmatpush1.msra.mxu0 0.0
    %245 = vmatprep.subr.mxu0 0.0
    %246 = vmatpush1.msra.mxu0 0.0
    %247 = vmatprep.subr.mxu0 0.0
    %248 = vmatpush1.msra.mxu0 0.0
    %249 = vmatprep.subr.mxu0 0.0
    %250 = vmatpush1.msra.mxu0 0.0
    %251 = vmatprep.subr.mxu0 0.0
    %252 = vmatpush1.msra.mxu0 0.0
    %253 = vmatprep.subr.mxu0 0.0
    %254 = vmatpush1.msra.mxu0 0.0
    %255 = vmatprep.subr.mxu0 0.0
    %256 = vmatpush1.msra.mxu0 0.0
    %257 = vmatprep.subr.mxu0 0.0
    %258 = vmatpush1.msra.mxu0 0.0
    %259 = vmatprep.mubr.f32.mxu0 0.0
    %260 = vmatmul.mubr.f32.gmra.mrb[0].mxu0 %v193
    %v261 = vpop.f32.mrb[0].mxu0
    %v262 = vadd.f32 0.0, %v261
    %v263 = vpop.f32.mrb[0].mxu0
    %264 = vdwg.mxu0
    %v265 = vlog2.pop %v115
    %v266 = vmul.f32 %v265, 0.6931472
    %v267 = vadd.f32 %v41, %v266
    %v268 = vmul.f32 %v188, %v267
    %v269 = vsub.f32 %v268, %v262
    %vm270 = vcmask 7168
    %v271 = vsel %vm270, %v269, 0.0
    %272 = vadd.xlane.f32.xlu0 %v271
    %v273 = vpop.xlane.xlu0 %272
    %v274 = vrot.slane %v273, 4
    %v275 = vadd.f32 %v273, %v274
    %v276 = vrot.slane %v275, 2
    %v277 = vadd.f32 %v275, %v276
    %v278 = vrot.slane %v277, 1
    %v279 = vadd.f32 %v277, %v278
    %s280 = vtos %v279
    %v281 = vstv %s280
    %282 = vst [vmem:[#allocation7] sm:$0xff] %v281
    // Predicated region
    $region18: #{tpu_custom_call.1} parent=1 // pred_check
      _
    $region19: #{tpu_custom_call.1} parent=1 // pred_check_branch
      %284 = sbr.rel (0) target = $region21
    $region20: #{tpu_custom_call.1} parent=1 // pred_region
      %s286 = ssub.s32 128, 128
      %287 = vsyncadd [#allocation4], %s286
      %s289 = sshll.u32 [#allocation7], 4
      %s290 = int_to_ptr.vmem [resolvable:$true] %s289
      %292 = dma.vmem_to_hbm [thread:$0]  %s290, 128, %s2, [#allocation4]
    $region21: #{tpu_custom_call.1} parent=1 // pred_fallthru
      _
    // Predicated region
    $region22: #{tpu_custom_call.1} parent=1 // pred_check
      _
    $region23: #{tpu_custom_call.1} parent=1 // pred_check_branch
      %294 = sbr.rel (0) target = $region25
    $region24: #{tpu_custom_call.1} parent=1 // pred_region
      %295 = dma.done [#allocation4], 128
    $region25: #{tpu_custom_call.1} parent=1 // pred_fallthru
      _
    %296 = vsyncpa [#allocation3], 1
    %297 = vsyncpa [#allocation6], 1
    %298 = vsyncpa [#allocation4], 1

</llo_original>
